<compile_context>
chip_gen: v5e
topology: v5e:2x2
jax: 0.10.0
libtpu: 0.0.40
codegen_flags: <defaults>
</compile_context>

<pallas_src>
import jax
import jax.numpy as jnp
from jax.experimental import pallas as pl
from jax.experimental.pallas import tpu as pltpu


def _se_kernel(x_ref, w1_ref, b1_ref, w2_ref, b2_ref, o_ref):
    # x_ref/o_ref: (Bblk, C, HW)  (last dim = full HW; padded lanes are masked)
    # w1_ref: (C, Cr)  b1_ref: (1, Cr)  w2_ref: (Cr, C)  b2_ref: (1, C)
    y = jnp.mean(x_ref[...].astype(jnp.float32), axis=-1)          # (Bblk, C)
    h = jnp.dot(y, w1_ref[...], preferred_element_type=jnp.float32) + b1_ref[...]
    h = jnp.maximum(h, 0.0)                                         # (Bblk, Cr)
    s = jnp.dot(h, w2_ref[...], preferred_element_type=jnp.float32) + b2_ref[...]
    s = jax.nn.sigmoid(s)                                           # (Bblk, C)
    # Re-read the ref (don't hold the block live across the FCs) -> no spill.
    o_ref[...] = (x_ref[...] * s[:, :, None]).astype(o_ref.dtype)


def _chip_config():
    """Return (vmem_limit_bytes, multi_core) for the current TPU generation."""
    vmem_cap = 128 * 1024 * 1024
    try:
        info = pltpu.get_tpu_info()
        vmem_cap = int(getattr(info, "vmem_capacity_bytes", vmem_cap))
    except Exception:
        pass
    kind = ""
    try:
        kind = jax.devices()[0].device_kind.lower()
    except Exception:
        pass
    # v7x: 64 MiB VMEM per TC, 2 TCs/chip.  v5e/v6e: 128 MiB, single TC.
    is_v7 = ("v7" in kind) or (vmem_cap <= 64 * 1024 * 1024)
    if is_v7:
        return 44 * 1024 * 1024, True
    return 96 * 1024 * 1024, False


def _pick_batch_block(B, C, HW, itemsize, vmem_limit_bytes, weight_bytes,
                      multi_core):
    """Largest batch block whose PADDED VMEM footprint fits the budget."""
    # VMEM tile padding: lane (last dim) -> 128, sublane (2nd-last) -> 8
    # for 4-byte dtypes, 16 for 2-byte dtypes.
    sub = 8 if itemsize >= 4 else 16
    lane_pad = -(-HW // 128) * 128
    sub_pad = -(-C // sub) * sub
    per_batch_padded = sub_pad * lane_pad * itemsize
    # 4 buffers live at once: input + output, each double-buffered.
    headroom = 4 * 1024 * 1024
    budget = max(vmem_limit_bytes - weight_bytes - headroom, per_batch_padded)
    target = budget // 4
    Bblk = max(1, min(B, int(target // per_batch_padded)))
    if multi_core and B >= 2:
        # Keep >= 2 grid steps so both v7x TensorCores get work.
        Bblk = min(Bblk, pl.cdiv(B, 2))
    return Bblk


def se_block(x, w1, b1, w2, b2, *, max_batch_block=None):
    """SEBlock forward: x * sigmoid(fc2(relu(fc1(avgpool(x))))).

    x: (B, C, H, W).  w1: (C, Cr), w2: (Cr, C) in (in, out) layout (already
    transposed from PyTorch's (out, in)); b1: (Cr,), b2: (C,).
    """
    B, C, H, W = x.shape
    HW = H * W
    Cr = w1.shape[1]
    itemsize = jnp.dtype(x.dtype).itemsize

    vmem_limit_bytes, multi_core = _chip_config()
    weight_bytes = (C * Cr + Cr + Cr * C + C) * 4
    Bblk = _pick_batch_block(B, C, HW, itemsize, vmem_limit_bytes,
                             weight_bytes, multi_core)
    if max_batch_block is not None:
        Bblk = max(1, min(Bblk, max_batch_block))
    grid = (pl.cdiv(B, Bblk),)

    x_in = x.reshape(B, C, HW)
    block = (Bblk, C, HW)
    b1_2d = b1.reshape(1, Cr).astype(jnp.float32)
    b2_2d = b2.reshape(1, C).astype(jnp.float32)
    w1_f = w1.astype(jnp.float32)
    w2_f = w2.astype(jnp.float32)

    cost = pl.CostEstimate(
        flops=int(2 * B * C * HW + 2 * B * (2 * C * Cr)),
        transcendentals=int(2 * B * C),
        bytes_accessed=int(2 * B * C * HW * itemsize
                           + 2 * C * Cr * 4 + (C + Cr) * 4),
    )

    out = pl.pallas_call(
        _se_kernel,
        out_shape=jax.ShapeDtypeStruct(x_in.shape, x.dtype),
        grid_spec=pltpu.PrefetchScalarGridSpec(
            num_scalar_prefetch=0,
            grid=grid,
            in_specs=[
                pl.BlockSpec(block, lambda b: (b, 0, 0)),
                pl.BlockSpec((C, Cr), lambda b: (0, 0)),   # resident weights
                pl.BlockSpec((1, Cr), lambda b: (0, 0)),
                pl.BlockSpec((Cr, C), lambda b: (0, 0)),
                pl.BlockSpec((1, C), lambda b: (0, 0)),
            ],
            out_specs=pl.BlockSpec(block, lambda b: (b, 0, 0)),
        ),
        compiler_params=pltpu.CompilerParams(
            dimension_semantics=("parallel",),
            vmem_limit_bytes=vmem_limit_bytes,
        ),
        cost_estimate=cost,
    )(x_in, w1_f, b1_2d, w2_f, b2_2d)

    return out.reshape(B, C, H, W)


def _reference(x, w1, b1, w2, b2):
    xf = x.astype(jnp.float32)
    y = jnp.mean(xf, axis=(2, 3))                          # (B, C)
    h = jnp.maximum(y @ w1 + b1, 0.0)
    s = jax.nn.sigmoid(h @ w2 + b2)
    return xf * s[:, :, None, None]


def _run_case(key, B, C, H, W, reduction, dtype=jnp.float32,
              max_batch_block=None, atol=1e-5, rtol=1e-5):
    Cr = max(C // reduction, 1)
    kx, k1, kb1, k2, kb2 = jax.random.split(key, 5)
    x = jax.random.normal(kx, (B, C, H, W), dtype=jnp.float32).astype(dtype)
    # PyTorch nn.Linear computes y = x @ W.T + b with W of shape (out, in);
    # weights are generated directly in the (in, out) layout used here.
    w1 = jax.random.normal(k1, (C, Cr), dtype=jnp.float32) * 0.1   # fc1: C -> Cr
    b1 = jax.random.normal(kb1, (Cr,), dtype=jnp.float32) * 0.1
    w2 = jax.random.normal(k2, (Cr, C), dtype=jnp.float32) * 0.1   # fc2: Cr -> C
    b2 = jax.random.normal(kb2, (C,), dtype=jnp.float32) * 0.1

    out = jax.block_until_ready(
        se_block(x, w1, b1, w2, b2, max_batch_block=max_batch_block))
    ref = _reference(x, w1, b1, w2, b2)
    assert jnp.allclose(out.astype(jnp.float32), ref, atol=atol, rtol=rtol), (
        f"mismatch vs reference for shape {(B, C, H, W)} dtype {dtype}")


if __name__ == "__main__":
    key = jax.random.PRNGKey(0)
    k1, k2, k3, k4 = jax.random.split(key, 4)

    # Case 1: early-stage-like SE placement, HW multiple of 128.
    _run_case(k1, B=8, C=32, H=16, W=16, reduction=16)

    # Case 2: late-stage-like SE placement, HW=7*7=49 not 128-aligned -> stays
    # in (B, C, HW) layout; the lane-axis mean relies on Mosaic masking the
    # padded lanes (verified here against the reference).
    _run_case(k2, B=4, C=128, H=7, W=7, reduction=16)

    # Case 3: cdiv-based batch blocking with a ragged last block (B=5, Bblk=2
    # -> grid of 3); padded rows are per-row garbage that is dropped on write.
    _run_case(k3, B=5, C=32, H=16, W=16, reduction=16, max_batch_block=2)

    # Case 4: bf16 activations (mean/FC accumulate in f32 inside the kernel).
    _run_case(k4, B=4, C=64, H=8, W=8, reduction=16, dtype=jnp.bfloat16,
              atol=5e-2, rtol=5e-2)

    print("KERNEL_OK")
</pallas_src>

<mosaic_0001>
module attributes {stable_mosaic.version = 11 : i64} {
  func.func @_se_kernel(%arg0: i32, %arg1: memref<8x32x256xf32, #tpu.memory_space<vmem>>, %arg2: memref<32x2xf32, #tpu.memory_space<vmem>>, %arg3: memref<1x2xf32, #tpu.memory_space<vmem>>, %arg4: memref<2x32xf32, #tpu.memory_space<vmem>>, %arg5: memref<1x32xf32, #tpu.memory_space<vmem>>, %arg6: memref<8x32x256xf32, #tpu.memory_space<vmem>>) attributes {dimension_semantics = [#tpu.dimension_semantics<parallel>], iteration_bounds = array<i64: 1>, scalar_prefetch = 0 : i64, scratch_operands = 0 : i64, tpu.core_type = #tpu.core_type<tc>, window_params = [{transform_indices = @transform_0, window_bounds = array<i64: 8, 32, 256>}, {pipeline_mode = #tpu.pipeline_mode<synchronous>, transform_indices = @transform_1, window_bounds = array<i64: 32, 2>}, {pipeline_mode = #tpu.pipeline_mode<synchronous>, transform_indices = @transform_2, window_bounds = array<i64: 1, 2>}, {pipeline_mode = #tpu.pipeline_mode<synchronous>, transform_indices = @transform_3, window_bounds = array<i64: 2, 32>}, {pipeline_mode = #tpu.pipeline_mode<synchronous>, transform_indices = @transform_4, window_bounds = array<i64: 1, 32>}, {transform_indices = @transform_5, window_bounds = array<i64: 8, 32, 256>}]} {
    %c0 = arith.constant 0 : index
    %c0_0 = arith.constant 0 : index
    %c0_1 = arith.constant 0 : index
    %0 = vector.load %arg1[%c0, %c0_0, %c0_1] : memref<8x32x256xf32, #tpu.memory_space<vmem>>, vector<8x32x256xf32>
    %cst = arith.constant dense<0.000000e+00> : vector<8x32xf32>
    %1 = vector.multi_reduction <add>, %0, %cst [2] : vector<8x32x256xf32> to vector<8x32xf32>
    %cst_2 = arith.constant 2.560000e+02 : f32
    %2 = vector.broadcast %cst_2 : f32 to vector<8x32xf32>
    %3 = arith.divf %1, %2 : vector<8x32xf32>
    %c0_3 = arith.constant 0 : index
    %c0_4 = arith.constant 0 : index
    %4 = vector.load %arg2[%c0_3, %c0_4] : memref<32x2xf32, #tpu.memory_space<vmem>>, vector<32x2xf32>
    %cst_5 = arith.constant dense<0.000000e+00> : vector<8x2xf32>
    %5 = tpu.matmul %3, %4, %cst_5 {dimension_numbers = #tpu.dot_dimension_numbers<[1], [0], [0], [1], [0, 0, 1, 1], [], []>} : vector<8x32xf32>, vector<32x2xf32>, vector<8x2xf32> -> vector<8x2xf32>
    %c0_6 = arith.constant 0 : index
    %c0_7 = arith.constant 0 : index
    %6 = vector.load %arg3[%c0_6, %c0_7] : memref<1x2xf32, #tpu.memory_space<vmem>>, vector<1x2xf32>
    %7 = vector.broadcast %6 : vector<1x2xf32> to vector<8x2xf32>
    %8 = arith.addf %5, %7 : vector<8x2xf32>
    %cst_8 = arith.constant 0.000000e+00 : f32
    %9 = vector.broadcast %cst_8 : f32 to vector<8x2xf32>
    %10 = arith.maximumf %8, %9 : vector<8x2xf32>
    %c0_9 = arith.constant 0 : index
    %c0_10 = arith.constant 0 : index
    %11 = vector.load %arg4[%c0_9, %c0_10] : memref<2x32xf32, #tpu.memory_space<vmem>>, vector<2x32xf32>
    %cst_11 = arith.constant dense<0.000000e+00> : vector<8x32xf32>
    %12 = tpu.matmul %10, %11, %cst_11 {dimension_numbers = #tpu.dot_dimension_numbers<[1], [0], [0], [1], [0, 0, 1, 1], [], []>} : vector<8x2xf32>, vector<2x32xf32>, vector<8x32xf32> -> vector<8x32xf32>
    %c0_12 = arith.constant 0 : index
    %c0_13 = arith.constant 0 : index
    %13 = vector.load %arg5[%c0_12, %c0_13] : memref<1x32xf32, #tpu.memory_space<vmem>>, vector<1x32xf32>
    %14 = vector.broadcast %13 : vector<1x32xf32> to vector<8x32xf32>
    %15 = arith.addf %12, %14 : vector<8x32xf32>
    %16 = arith.negf %15 : vector<8x32xf32>
    %17 = math.exp %16 : vector<8x32xf32>
    %cst_14 = arith.constant 1.000000e+00 : f32
    %18 = vector.broadcast %cst_14 : f32 to vector<8x32xf32>
    %19 = arith.addf %18, %17 : vector<8x32xf32>
    %20 = arith.divf %18, %19 : vector<8x32xf32>
    %c0_15 = arith.constant 0 : index
    %c0_16 = arith.constant 0 : index
    %c0_17 = arith.constant 0 : index
    %21 = vector.load %arg1[%c0_15, %c0_16, %c0_17] : memref<8x32x256xf32, #tpu.memory_space<vmem>>, vector<8x32x256xf32>
    %22 = vector.shape_cast %20 : vector<8x32xf32> to vector<8x32x1xf32>
    %23 = vector.broadcast %22 : vector<8x32x1xf32> to vector<8x32x256xf32>
    %24 = arith.mulf %21, %23 : vector<8x32x256xf32>
    %c0_18 = arith.constant 0 : index
    %c0_19 = arith.constant 0 : index
    %c0_20 = arith.constant 0 : index
    %25 = vector.load %arg6[%c0_18, %c0_19, %c0_20] : memref<8x32x256xf32, #tpu.memory_space<vmem>>, vector<8x32x256xf32>
    tpu.vector_store %arg6[%c0_18, %c0_19, %c0_20], %24 {strides = array<i32>} : memref<8x32x256xf32, #tpu.memory_space<vmem>>, vector<8x32x256xf32>,
    return
  }
  func.func @transform_0(%arg0: i32) -> (i32, i32, i32) {
    %c0_i32 = arith.constant 0 : i32
    %c0_i32_0 = arith.constant 0 : i32
    %c0_i32_1 = arith.constant 0 : i32
    return %arg0, %c0_i32, %c0_i32_0 : i32, i32, i32
  }
  func.func @transform_1(%arg0: i32) -> (i32, i32) {
    %c0_i32 = arith.constant 0 : i32
    %c0_i32_0 = arith.constant 0 : i32
    %c0_i32_1 = arith.constant 0 : i32
    return %c0_i32, %c0_i32_0 : i32, i32
  }
  func.func @transform_2(%arg0: i32) -> (i32, i32) {
    %c0_i32 = arith.constant 0 : i32
    %c0_i32_0 = arith.constant 0 : i32
    %c0_i32_1 = arith.constant 0 : i32
    return %c0_i32, %c0_i32_0 : i32, i32
  }
  func.func @transform_3(%arg0: i32) -> (i32, i32) {
    %c0_i32 = arith.constant 0 : i32
    %c0_i32_0 = arith.constant 0 : i32
    %c0_i32_1 = arith.constant 0 : i32
    return %c0_i32, %c0_i32_0 : i32, i32
  }
  func.func @transform_4(%arg0: i32) -> (i32, i32) {
    %c0_i32 = arith.constant 0 : i32
    %c0_i32_0 = arith.constant 0 : i32
    %c0_i32_1 = arith.constant 0 : i32
    return %c0_i32, %c0_i32_0 : i32, i32
  }
  func.func @transform_5(%arg0: i32) -> (i32, i32, i32) {
    %c0_i32 = arith.constant 0 : i32
    %c0_i32_0 = arith.constant 0 : i32
    %c0_i32_1 = arith.constant 0 : i32
    return %arg0, %c0_i32, %c0_i32_0 : i32, i32, i32
  }
}

</mosaic_0001>

<llo_original>
// kernel: tpu_custom_call.1
$region0: #{tpu_custom_call.1}
  #allocation0 [shape = 'u32[]', space=smem, size = 0x4, offset = 0x4, fixed_abs, tag = 'smem constant byte address 0x4 - core index']
  #allocation1 [shape = 'u32[72,128]{1,0:T(1,128)}', space=vmem, size = 0x9000, scoped, tag = 'internal scratch']
  %s0 = inlined_call_operand.hbm [shape: f32[8,32,256], index: 0, kind: input, shape index: {}]
  %s1 = inlined_call_operand.vmem [shape: f32[32,2], index: 1, kind: input, shape index: {}]
  %s2 = inlined_call_operand.vmem [shape: f32[1,2], index: 2, kind: input, shape index: {}]
  %s3 = inlined_call_operand.vmem [shape: f32[2,32], index: 3, kind: input, shape index: {}]
  %s4 = inlined_call_operand.vmem [shape: f32[1,32], index: 4, kind: input, shape index: {}]
  %s5 = inlined_call_operand.hbm [shape: f32[8,32,256], index: 5, kind: output, shape index: {}]
  %s6 = sld [smem:[#allocation0]]
  $region34: #{tpu_custom_call.1} parent=0
    _
  %s8 = ssub.s32 1, %s6
  %s9 = scalar_select 0, %s8, %s6
  $region1: #{tpu_custom_call.1} parent=0
    #allocation2 [shape = 'u8[262144]{0}', space=vmem, size = 0x40000, scoped, tag = 'input window, operand 0, single buffered']
    #allocation3 [shape = 's32[1]{0}', space=sflag, size = 0x4, scoped, tag = 'scoped memory for tpu_custom_call.1']
    #allocation4 [shape = 's32[1]{0}', space=sflag, size = 0x4, scoped, tag = 'scoped memory for tpu_custom_call.1']
    #allocation5 [shape = 'u8[262144]{0}', space=vmem, size = 0x40000, scoped, tag = 'output window, operand 0, single buffered']
    %10 = vsyncpa [#allocation3], 0
    %11 = vsyncpa [#allocation4], 0
    // Predicated region
    $region2: #{tpu_custom_call.1} parent=1 // pred_check
      _
    $region3: #{tpu_custom_call.1} parent=1 // pred_check_branch
      %13 = sbr.rel (0) target = $region5
    $region4: #{tpu_custom_call.1} parent=1 // pred_region
      %15 = vsyncadd [#allocation3], 0
      %s16 = sshll.u32 %s0, 4
      %s17 = int_to_ptr.hbm [resolvable:$true] %s16
      %s18 = sshll.u32 [#allocation2], 4
      %s19 = int_to_ptr.vmem [resolvable:$true] %s18
      %24 = dma.hbm_to_vmem [thread:$0]  %s17, 8192, %s19, [#allocation3], 256, 256, 16
    $region5: #{tpu_custom_call.1} parent=1 // pred_fallthru
      _
    // Predicated region
    $region6: #{tpu_custom_call.1} parent=1 // pred_check
      _
    $region7: #{tpu_custom_call.1} parent=1 // pred_check_branch
      %26 = sbr.rel (0) target = $region9
    $region8: #{tpu_custom_call.1} parent=1 // pred_region
      _
    $region9: #{tpu_custom_call.1} parent=1 // pred_fallthru
      _
    // Predicated region
    $region10: #{tpu_custom_call.1} parent=1 // pred_check
      _
    $region11: #{tpu_custom_call.1} parent=1 // pred_check_branch
      %28 = sbr.rel (0) target = $region13
    $region12: #{tpu_custom_call.1} parent=1 // pred_region
      _
    $region13: #{tpu_custom_call.1} parent=1 // pred_fallthru
      _
    // Predicated region
    $region14: #{tpu_custom_call.1} parent=1 // pred_check
      _
    $region15: #{tpu_custom_call.1} parent=1 // pred_check_branch
      %30 = sbr.rel (0) target = $region17
    $region16: #{tpu_custom_call.1} parent=1 // pred_region
      _
    $region17: #{tpu_custom_call.1} parent=1 // pred_fallthru
      _
    // Predicated region
    $region18: #{tpu_custom_call.1} parent=1 // pred_check
      _
    $region19: #{tpu_custom_call.1} parent=1 // pred_check_branch
      %32 = sbr.rel (0) target = $region21
    $region20: #{tpu_custom_call.1} parent=1 // pred_region
      _
    $region21: #{tpu_custom_call.1} parent=1 // pred_fallthru
      _
    // Predicated region
    $region22: #{tpu_custom_call.1} parent=1 // pred_check
      _
    $region23: #{tpu_custom_call.1} parent=1 // pred_check_branch
      %34 = sbr.rel (0) target = $region25
    $region24: #{tpu_custom_call.1} parent=1 // pred_region
      %36 = dma.done [#allocation3], 8192
    $region25: #{tpu_custom_call.1} parent=1 // pred_fallthru
      _
    %v37 = vld [vmem:[#allocation2] sm:$0xff]
    %v38 = vld [vmem:[#allocation2 + $0x8] sm:$0xff]
    %v39 = vld [vmem:[#allocation2 + $0x10] sm:$0xff]
    %v40 = vld [vmem:[#allocation2 + $0x18] sm:$0xff]
    %v41 = vld [vmem:[#allocation2 + $0x20] sm:$0xff]
    %v42 = vld [vmem:[#allocation2 + $0x28] sm:$0xff]
    %v43 = vld [vmem:[#allocation2 + $0x30] sm:$0xff]
    %v44 = vld [vmem:[#allocation2 + $0x38] sm:$0xff]
    %v45 = vld [vmem:[#allocation2 + $0x40] sm:$0xff]
    %v46 = vld [vmem:[#allocation2 + $0x48] sm:$0xff]
    %v47 = vld [vmem:[#allocation2 + $0x50] sm:$0xff]
    %v48 = vld [vmem:[#allocation2 + $0x58] sm:$0xff]
    %v49 = vld [vmem:[#allocation2 + $0x60] sm:$0xff]
    %v50 = vld [vmem:[#allocation2 + $0x68] sm:$0xff]
    %v51 = vld [vmem:[#allocation2 + $0x70] sm:$0xff]
    %v52 = vld [vmem:[#allocation2 + $0x78] sm:$0xff]
    %v53 = vld [vmem:[#allocation2 + $0x80] sm:$0xff]
    %v54 = vld [vmem:[#allocation2 + $0x88] sm:$0xff]
    %v55 = vld [vmem:[#allocation2 + $0x90] sm:$0xff]
    %v56 = vld [vmem:[#allocation2 + $0x98] sm:$0xff]
    %v57 = vld [vmem:[#allocation2 + $0xa0] sm:$0xff]
    %v58 = vld [vmem:[#allocation2 + $0xa8] sm:$0xff]
    %v59 = vld [vmem:[#allocation2 + $0xb0] sm:$0xff]
    %v60 = vld [vmem:[#allocation2 + $0xb8] sm:$0xff]
    %v61 = vld [vmem:[#allocation2 + $0xc0] sm:$0xff]
    %v62 = vld [vmem:[#allocation2 + $0xc8] sm:$0xff]
    %v63 = vld [vmem:[#allocation2 + $0xd0] sm:$0xff]
    %v64 = vld [vmem:[#allocation2 + $0xd8] sm:$0xff]
    %v65 = vld [vmem:[#allocation2 + $0xe0] sm:$0xff]
    %v66 = vld [vmem:[#allocation2 + $0xe8] sm:$0xff]
    %v67 = vld [vmem:[#allocation2 + $0xf0] sm:$0xff]
    %v68 = vld [vmem:[#allocation2 + $0xf8] sm:$0xff]
    %v69 = vld [vmem:[#allocation2 + $0x100] sm:$0xff]
    %v70 = vld [vmem:[#allocation2 + $0x108] sm:$0xff]
    %v71 = vld [vmem:[#allocation2 + $0x110] sm:$0xff]
    %v72 = vld [vmem:[#allocation2 + $0x118] sm:$0xff]
    %v73 = vld [vmem:[#allocation2 + $0x120] sm:$0xff]
    %v74 = vld [vmem:[#allocation2 + $0x128] sm:$0xff]
    %v75 = vld [vmem:[#allocation2 + $0x130] sm:$0xff]
    %v76 = vld [vmem:[#allocation2 + $0x138] sm:$0xff]
    %v77 = vld [vmem:[#allocation2 + $0x140] sm:$0xff]
    %v78 = vld [vmem:[#allocation2 + $0x148] sm:$0xff]
    %v79 = vld [vmem:[#allocation2 + $0x150] sm:$0xff]
    %v80 = vld [vmem:[#allocation2 + $0x158] sm:$0xff]
    %v81 = vld [vmem:[#allocation2 + $0x160] sm:$0xff]
    %v82 = vld [vmem:[#allocation2 + $0x168] sm:$0xff]
    %v83 = vld [vmem:[#allocation2 + $0x170] sm:$0xff]
    %v84 = vld [vmem:[#allocation2 + $0x178] sm:$0xff]
    %v85 = vld [vmem:[#allocation2 + $0x180] sm:$0xff]
    %v86 = vld [vmem:[#allocation2 + $0x188] sm:$0xff]
    %v87 = vld [vmem:[#allocation2 + $0x190] sm:$0xff]
    %v88 = vld [vmem:[#allocation2 + $0x198] sm:$0xff]
    %v89 = vld [vmem:[#allocation2 + $0x1a0] sm:$0xff]
    %v90 = vld [vmem:[#allocation2 + $0x1a8] sm:$0xff]
    %v91 = vld [vmem:[#allocation2 + $0x1b0] sm:$0xff]
    %v92 = vld [vmem:[#allocation2 + $0x1b8] sm:$0xff]
    %v93 = vld [vmem:[#allocation2 + $0x1c0] sm:$0xff]
    %v94 = vld [vmem:[#allocation2 + $0x1c8] sm:$0xff]
    %v95 = vld [vmem:[#allocation2 + $0x1d0] sm:$0xff]
    %v96 = vld [vmem:[#allocation2 + $0x1d8] sm:$0xff]
    %v97 = vld [vmem:[#allocation2 + $0x1e0] sm:$0xff]
    %v98 = vld [vmem:[#allocation2 + $0x1e8] sm:$0xff]
    %v99 = vld [vmem:[#allocation2 + $0x1f0] sm:$0xff]
    %v100 = vld [vmem:[#allocation2 + $0x1f8] sm:$0xff]
    %v101 = vadd.f32 %v37, %v38
    %102 = vadd.xlane.f32.xlu0 %v101
    %v103 = vpop.xlane.xlu0 %102
    %v104 = vadd.f32 %v39, %v40
    %105 = vadd.xlane.f32.xlu0 %v104
    %v106 = vpop.xlane.xlu0 %105
    %v107 = vadd.f32 %v41, %v42
    %108 = vadd.xlane.f32.xlu0 %v107
    %v109 = vpop.xlane.xlu0 %108
    %v110 = vadd.f32 %v43, %v44
    %111 = vadd.xlane.f32.xlu0 %v110
    %v112 = vpop.xlane.xlu0 %111
    %v113 = vadd.f32 %v45, %v46
    %114 = vadd.xlane.f32.xlu0 %v113
    %v115 = vpop.xlane.xlu0 %114
    %v116 = vadd.f32 %v47, %v48
    %117 = vadd.xlane.f32.xlu0 %v116
    %v118 = vpop.xlane.xlu0 %117
    %v119 = vadd.f32 %v49, %v50
    %120 = vadd.xlane.f32.xlu0 %v119
    %v121 = vpop.xlane.xlu0 %120
    %v122 = vadd.f32 %v51, %v52
    %123 = vadd.xlane.f32.xlu0 %v122
    %v124 = vpop.xlane.xlu0 %123
    %v125 = vadd.f32 %v53, %v54
    %126 = vadd.xlane.f32.xlu0 %v125
    %v127 = vpop.xlane.xlu0 %126
    %v128 = vadd.f32 %v55, %v56
    %129 = vadd.xlane.f32.xlu0 %v128
    %v130 = vpop.xlane.xlu0 %129
    %v131 = vadd.f32 %v57, %v58
    %132 = vadd.xlane.f32.xlu0 %v131
    %v133 = vpop.xlane.xlu0 %132
    %v134 = vadd.f32 %v59, %v60
    %135 = vadd.xlane.f32.xlu0 %v134
    %v136 = vpop.xlane.xlu0 %135
    %v137 = vadd.f32 %v61, %v62
    %138 = vadd.xlane.f32.xlu0 %v137
    %v139 = vpop.xlane.xlu0 %138
    %v140 = vadd.f32 %v63, %v64
    %141 = vadd.xlane.f32.xlu0 %v140
    %v142 = vpop.xlane.xlu0 %141
    %v143 = vadd.f32 %v65, %v66
    %144 = vadd.xlane.f32.xlu0 %v143
    %v145 = vpop.xlane.xlu0 %144
    %v146 = vadd.f32 %v67, %v68
    %147 = vadd.xlane.f32.xlu0 %v146
    %v148 = vpop.xlane.xlu0 %147
    %v149 = vadd.f32 %v69, %v70
    %150 = vadd.xlane.f32.xlu0 %v149
    %v151 = vpop.xlane.xlu0 %150
    %v152 = vadd.f32 %v71, %v72
    %153 = vadd.xlane.f32.xlu0 %v152
    %v154 = vpop.xlane.xlu0 %153
    %v155 = vadd.f32 %v73, %v74
    %156 = vadd.xlane.f32.xlu0 %v155
    %v157 = vpop.xlane.xlu0 %156
    %v158 = vadd.f32 %v75, %v76
    %159 = vadd.xlane.f32.xlu0 %v158
    %v160 = vpop.xlane.xlu0 %159
    %v161 = vadd.f32 %v77, %v78
    %162 = vadd.xlane.f32.xlu0 %v161
    %v163 = vpop.xlane.xlu0 %162
    %v164 = vadd.f32 %v79, %v80
    %165 = vadd.xlane.f32.xlu0 %v164
    %v166 = vpop.xlane.xlu0 %165
    %v167 = vadd.f32 %v81, %v82
    %168 = vadd.xlane.f32.xlu0 %v167
    %v169 = vpop.xlane.xlu0 %168
    %v170 = vadd.f32 %v83, %v84
    %171 = vadd.xlane.f32.xlu0 %v170
    %v172 = vpop.xlane.xlu0 %171
    %v173 = vadd.f32 %v85, %v86
    %174 = vadd.xlane.f32.xlu0 %v173
    %v175 = vpop.xlane.xlu0 %174
    %v176 = vadd.f32 %v87, %v88
    %177 = vadd.xlane.f32.xlu0 %v176
    %v178 = vpop.xlane.xlu0 %177
    %v179 = vadd.f32 %v89, %v90
    %180 = vadd.xlane.f32.xlu0 %v179
    %v181 = vpop.xlane.xlu0 %180
    %v182 = vadd.f32 %v91, %v92
    %183 = vadd.xlane.f32.xlu0 %v182
    %v184 = vpop.xlane.xlu0 %183
    %v185 = vadd.f32 %v93, %v94
    %186 = vadd.xlane.f32.xlu0 %v185
    %v187 = vpop.xlane.xlu0 %186
    %v188 = vadd.f32 %v95, %v96
    %189 = vadd.xlane.f32.xlu0 %v188
    %v190 = vpop.xlane.xlu0 %189
    %v191 = vadd.f32 %v97, %v98
    %192 = vadd.xlane.f32.xlu0 %v191
    %v193 = vpop.xlane.xlu0 %192
    %v194 = vadd.f32 %v99, %v100
    %195 = vadd.xlane.f32.xlu0 %v194
    %v196 = vpop.xlane.xlu0 %195
    %v197 = vrcp.pop 256.0
    %v198 = vmul.f32 256.0, %v197
    %v199 = vsub.f32 1.0, %v198
    %v200 = vmul.f32 %v197, %v199
    %v201 = vadd.f32 %v197, %v200
    %vm202 = vweird.f32 %v197
    %v203 = vsel %vm202, %v197, %v201
    %v204 = vmul.f32 %v103, %v203
    %v205 = vmul.f32 %v106, %v203
    %v206 = vmul.f32 %v109, %v203
    %v207 = vmul.f32 %v112, %v203
    %v208 = vmul.f32 %v115, %v203
    %v209 = vmul.f32 %v118, %v203
    %v210 = vmul.f32 %v121, %v203
    %v211 = vmul.f32 %v124, %v203
    %v212 = vmul.f32 %v127, %v203
    %v213 = vmul.f32 %v130, %v203
    %v214 = vmul.f32 %v133, %v203
    %v215 = vmul.f32 %v136, %v203
    %v216 = vmul.f32 %v139, %v203
    %v217 = vmul.f32 %v142, %v203
    %v218 = vmul.f32 %v145, %v203
    %v219 = vmul.f32 %v148, %v203
    %v220 = vmul.f32 %v151, %v203
    %v221 = vmul.f32 %v154, %v203
    %v222 = vmul.f32 %v157, %v203
    %v223 = vmul.f32 %v160, %v203
    %v224 = vmul.f32 %v163, %v203
    %v225 = vmul.f32 %v166, %v203
    %v226 = vmul.f32 %v169, %v203
    %v227 = vmul.f32 %v172, %v203
    %v228 = vmul.f32 %v175, %v203
    %v229 = vmul.f32 %v178, %v203
    %v230 = vmul.f32 %v181, %v203
    %v231 = vmul.f32 %v184, %v203
    %v232 = vmul.f32 %v187, %v203
    %v233 = vmul.f32 %v190, %v203
    %v234 = vmul.f32 %v193, %v203
    %v235 = vmul.f32 %v196, %v203
    %v236 = vld [vmem:[%s1] sm:$0xff]
    %v237 = vld [vmem:[%s1 + $0x8] sm:$0xff]
    %v238 = vld [vmem:[%s1 + $0x10] sm:$0xff]
    %v239 = vld [vmem:[%s1 + $0x18] sm:$0xff]
    %v240 = vld [vmem:[%s2] sm:$0x1]
    %v242 = vperm.slane %v240, 0
    %v276 = vlaneseq
    %v277 = vand.u32 %v276, 127
    %v278 = vperm.slane %v204, %v277
    %v279 = vadd.s32 %v277, 4294967288
    %v280 = vperm.slane %v205, %v279
    %vm281 = vcmask 130112
    %v282 = vsel %vm281, %v280, %v278
    %v283 = vadd.s32 %v277, 4294967280
    %v284 = vperm.slane %v206, %v283
    %vm285 = vcmask 195712
    %v286 = vsel %vm285, %v284, %v282
    %v287 = vadd.s32 %v277, 4294967272
    %v288 = vperm.slane %v207, %v287
    %vm289 = vcmask 261312
    %v290 = vsel %vm289, %v288, %v286
    %v291 = vperm.slane %v208, %v277
    %v292 = vperm.slane %v209, %v279
    %v293 = vsel %vm281, %v292, %v291
    %v294 = vperm.slane %v210, %v283
    %v295 = vsel %vm285, %v294, %v293
    %v296 = vperm.slane %v211, %v287
    %v297 = vsel %vm289, %v296, %v295
    %v298 = vperm.slane %v212, %v277
    %v299 = vperm.slane %v213, %v279
    %v300 = vsel %vm281, %v299, %v298
    %v301 = vperm.slane %v214, %v283
    %v302 = vsel %vm285, %v301, %v300
    %v303 = vperm.slane %v215, %v287
    %v304 = vsel %vm289, %v303, %v302
    %v305 = vperm.slane %v216, %v277
    %v306 = vperm.slane %v217, %v279
    %v307 = vsel %vm281, %v306, %v305
    %v308 = vperm.slane %v218, %v283
    %v309 = vsel %vm285, %v308, %v307
    %v310 = vperm.slane %v219, %v287
    %v311 = vsel %vm289, %v310, %v309
    %v312 = vperm.slane %v220, %v277
    %v313 = vperm.slane %v221, %v279
    %v314 = vsel %vm281, %v313, %v312
    %v315 = vperm.slane %v222, %v283
    %v316 = vsel %vm285, %v315, %v314
    %v317 = vperm.slane %v223, %v287
    %v318 = vsel %vm289, %v317, %v316
    %v319 = vperm.slane %v224, %v277
    %v320 = vperm.slane %v225, %v279
    %v321 = vsel %vm281, %v320, %v319
    %v322 = vperm.slane %v226, %v283
    %v323 = vsel %vm285, %v322, %v321
    %v324 = vperm.slane %v227, %v287
    %v325 = vsel %vm289, %v324, %v323
    %v326 = vperm.slane %v228, %v277
    %v327 = vperm.slane %v229, %v279
    %v328 = vsel %vm281, %v327, %v326
    %v329 = vperm.slane %v230, %v283
    %v330 = vsel %vm285, %v329, %v328
    %v331 = vperm.slane %v231, %v287
    %v332 = vsel %vm289, %v331, %v330
    %v333 = vperm.slane %v232, %v277
    %v334 = vperm.slane %v233, %v279
    %v335 = vsel %vm281, %v334, %v333
    %v336 = vperm.slane %v234, %v283
    %v337 = vsel %vm285, %v336, %v335
    %v338 = vperm.slane %v235, %v287
    %v339 = vsel %vm289, %v338, %v337
    %vm340 = vcmask 1041409
    %v341 = vsel %vm340, %v297, %v290
    %vm342 = vcmask 1042434
    %v343 = vsel %vm342, %v304, %v341
    %vm344 = vcmask 1043459
    %v345 = vsel %vm344, %v311, %v343
    %vm346 = vcmask 1044484
    %v347 = vsel %vm346, %v318, %v345
    %vm348 = vcmask 1045509
    %v349 = vsel %vm348, %v325, %v347
    %vm350 = vcmask 1046534
    %v351 = vsel %vm350, %v332, %v349
    %vm352 = vcmask 1047559
    %v353 = vsel %vm352, %v339, %v351
    %vm354 = vcmask 261120
    %v355 = vsel %vm354, %v353, 0
    %357 = vmatpush.msra.mxu0 0.0
    %358 = vmatpush.msra.mxu0 0.0
    %359 = vmatpush.msra.mxu0 0.0
    %360 = vmatpush.msra.mxu0 0.0
    %361 = vmatpush.msra.mxu0 0.0
    %362 = vmatpush.msra.mxu0 0.0
    %363 = vmatpush.msra.mxu0 0.0
    %364 = vmatpush.msra.mxu0 0.0
    %365 = vmatpush.msra.mxu0 0.0
    %366 = vmatpush.msra.mxu0 0.0
    %367 = vmatpush.msra.mxu0 0.0
    %368 = vmatpush.msra.mxu0 0.0
    %369 = vmatpush.msra.mxu0 %v239
    %370 = vmatpush.msra.mxu0 %v238
    %371 = vmatpush.msra.mxu0 %v237
    %372 = vmatpush.msra.mxu0 %v236
    %373 = vmatmul.f32.gmra.mxu0 %v355
    %v374 = vpop.f32.mrf.mxu0
    %v375 = vadd.f32 %v242, %v374
    %376 = vdwg.mxu0
    %v377 = vmax.f32 %v375, 0.0
    %v378 = vld [vmem:[%s3] sm:$0x3]
    %v379 = vld [vmem:[%s4] sm:$0x1]
    %v381 = vperm.slane %v379, 0
    %vm383 = vcmask 15360
    %v385 = vsel %vm383, %v377, 0
    %vm387 = vcmask 1041408
    %v389 = vsel %vm387, %v378, 0
    %391 = vmatpush.msra.mxu0 0.0
    %392 = vmatpush.msra.mxu0 0.0
    %393 = vmatpush.msra.mxu0 0.0
    %394 = vmatpush.msra.mxu0 0.0
    %395 = vmatpush.msra.mxu0 0.0
    %396 = vmatpush.msra.mxu0 0.0
    %397 = vmatpush.msra.mxu0 0.0
    %398 = vmatpush.msra.mxu0 0.0
    %399 = vmatpush.msra.mxu0 0.0
    %400 = vmatpush.msra.mxu0 0.0
    %401 = vmatpush.msra.mxu0 0.0
    %402 = vmatpush.msra.mxu0 0.0
    %403 = vmatpush.msra.mxu0 0.0
    %404 = vmatpush.msra.mxu0 0.0
    %405 = vmatpush.msra.mxu0 0.0
    %406 = vmatpush.msra.mxu0 %v389
    %407 = vmatmul.f32.gmra.mxu0 %v385
    %v408 = vpop.f32.mrf.mxu0
    %v409 = vadd.f32 %v381, %v408
    %410 = vdwg.mxu0
    %v411 = vxor.u32 %v409, 2147483648
    %v412 = vmul.f32 %v411, 1.442695
    %v413 = vpow.pop %v412
    %v414 = vadd.f32 %v413, 1.0
    %v415 = vrcp.pop %v414
    %v416 = vmul.f32 %v414, %v415
    %v417 = vsub.f32 1.0, %v416
    %v418 = vmul.f32 %v415, %v417
    %v419 = vadd.f32 %v415, %v418
    %vm420 = vweird.f32 %v414
    %vm421 = vweird.f32 %v415
    %vm422 = vmor %vm420, %vm421
    %v423 = vsel %vm422, %v415, %v419
    %v424 = vand.u32 2147483647, %v414
    %vm425 = vcmp.eq.f32.partialorder %v424, 8.507059e+37
    %v426 = vand.u32 %v414, 2147483648
    %v427 = vor.u32 1.1754944e-38, %v426
    %v428 = vsel %vm425, %v427, %v423
    %v429 = vmul.f32 1.0, %v428
    %v430 = vperm.slane %v429, 0
    %v431 = vlaneseq
    %v432 = vshrl.u32 %v431, 7
    %434 = vset.pattern.permute.xlu0 %v432
    %435 = vperm.xlu0 %434, %v430
    %v436 = vpop.permute.xlu0 %435
    %v437 = vlaneseq
    %v438 = vshrl.u32 %v437, 7
    %v439 = vadd.s32 %v438, 8
    %440 = vset.pattern.permute.xlu0 %v439
    %441 = vperm.xlu0 %440, %v430
    %v442 = vpop.permute.xlu0 %441
    %v443 = vlaneseq
    %v444 = vshrl.u32 %v443, 7
    %v445 = vadd.s32 %v444, 16
    %446 = vset.pattern.permute.xlu0 %v445
    %447 = vperm.xlu0 %446, %v430
    %v448 = vpop.permute.xlu0 %447
    %v449 = vlaneseq
    %v450 = vshrl.u32 %v449, 7
    %v451 = vadd.s32 %v450, 24
    %452 = vset.pattern.permute.xlu0 %v451
    %453 = vperm.xlu0 %452, %v430
    %v454 = vpop.permute.xlu0 %453
    %v455 = vperm.slane %v429, 1
    %v456 = vlaneseq
    %v457 = vshrl.u32 %v456, 7
    %459 = vset.pattern.permute.xlu0 %v457
    %460 = vperm.xlu0 %459, %v455
    %v461 = vpop.permute.xlu0 %460
    %v462 = vlaneseq
    %v463 = vshrl.u32 %v462, 7
    %v464 = vadd.s32 %v463, 8
    %465 = vset.pattern.permute.xlu0 %v464
    %466 = vperm.xlu0 %465, %v455
    %v467 = vpop.permute.xlu0 %466
    %v468 = vlaneseq
    %v469 = vshrl.u32 %v468, 7
    %v470 = vadd.s32 %v469, 16
    %471 = vset.pattern.permute.xlu0 %v470
    %472 = vperm.xlu0 %471, %v455
    %v473 = vpop.permute.xlu0 %472
    %v474 = vlaneseq
    %v475 = vshrl.u32 %v474, 7
    %v476 = vadd.s32 %v475, 24
    %477 = vset.pattern.permute.xlu0 %v476
    %478 = vperm.xlu0 %477, %v455
    %v479 = vpop.permute.xlu0 %478
    %v480 = vperm.slane %v429, 2
    %v481 = vlaneseq
    %v482 = vshrl.u32 %v481, 7
    %484 = vset.pattern.permute.xlu0 %v482
    %485 = vperm.xlu0 %484, %v480
    %v486 = vpop.permute.xlu0 %485
    %v487 = vlaneseq
    %v488 = vshrl.u32 %v487, 7
    %v489 = vadd.s32 %v488, 8
    %490 = vset.pattern.permute.xlu0 %v489
    %491 = vperm.xlu0 %490, %v480
    %v492 = vpop.permute.xlu0 %491
    %v493 = vlaneseq
    %v494 = vshrl.u32 %v493, 7
    %v495 = vadd.s32 %v494, 16
    %496 = vset.pattern.permute.xlu0 %v495
    %497 = vperm.xlu0 %496, %v480
    %v498 = vpop.permute.xlu0 %497
    %v499 = vlaneseq
    %v500 = vshrl.u32 %v499, 7
    %v501 = vadd.s32 %v500, 24
    %502 = vset.pattern.permute.xlu0 %v501
    %503 = vperm.xlu0 %502, %v480
    %v504 = vpop.permute.xlu0 %503
    %v505 = vperm.slane %v429, 3
    %v506 = vlaneseq
    %v507 = vshrl.u32 %v506, 7
    %509 = vset.pattern.permute.xlu0 %v507
    %510 = vperm.xlu0 %509, %v505
    %v511 = vpop.permute.xlu0 %510
    %v512 = vlaneseq
    %v513 = vshrl.u32 %v512, 7
    %v514 = vadd.s32 %v513, 8
    %515 = vset.pattern.permute.xlu0 %v514
    %516 = vperm.xlu0 %515, %v505
    %v517 = vpop.permute.xlu0 %516
    %v518 = vlaneseq
    %v519 = vshrl.u32 %v518, 7
    %v520 = vadd.s32 %v519, 16
    %521 = vset.pattern.permute.xlu0 %v520
    %522 = vperm.xlu0 %521, %v505
    %v523 = vpop.permute.xlu0 %522
    %v524 = vlaneseq
    %v525 = vshrl.u32 %v524, 7
    %v526 = vadd.s32 %v525, 24
    %527 = vset.pattern.permute.xlu0 %v526
    %528 = vperm.xlu0 %527, %v505
    %v529 = vpop.permute.xlu0 %528
    %v530 = vperm.slane %v429, 4
    %v531 = vlaneseq
    %v532 = vshrl.u32 %v531, 7
    %534 = vset.pattern.permute.xlu0 %v532
    %535 = vperm.xlu0 %534, %v530
    %v536 = vpop.permute.xlu0 %535
    %v537 = vlaneseq
    %v538 = vshrl.u32 %v537, 7
    %v539 = vadd.s32 %v538, 8
    %540 = vset.pattern.permute.xlu0 %v539
    %541 = vperm.xlu0 %540, %v530
    %v542 = vpop.permute.xlu0 %541
    %v543 = vlaneseq
    %v544 = vshrl.u32 %v543, 7
    %v545 = vadd.s32 %v544, 16
    %546 = vset.pattern.permute.xlu0 %v545
    %547 = vperm.xlu0 %546, %v530
    %v548 = vpop.permute.xlu0 %547
    %v549 = vlaneseq
    %v550 = vshrl.u32 %v549, 7
    %v551 = vadd.s32 %v550, 24
    %552 = vset.pattern.permute.xlu0 %v551
    %553 = vperm.xlu0 %552, %v530
    %v554 = vpop.permute.xlu0 %553
    %v555 = vperm.slane %v429, 5
    %v556 = vlaneseq
    %v557 = vshrl.u32 %v556, 7
    %559 = vset.pattern.permute.xlu0 %v557
    %560 = vperm.xlu0 %559, %v555
    %v561 = vpop.permute.xlu0 %560
    %v562 = vlaneseq
    %v563 = vshrl.u32 %v562, 7
    %v564 = vadd.s32 %v563, 8
    %565 = vset.pattern.permute.xlu0 %v564
    %566 = vperm.xlu0 %565, %v555
    %v567 = vpop.permute.xlu0 %566
    %v568 = vlaneseq
    %v569 = vshrl.u32 %v568, 7
    %v570 = vadd.s32 %v569, 16
    %571 = vset.pattern.permute.xlu0 %v570
    %572 = vperm.xlu0 %571, %v555
    %v573 = vpop.permute.xlu0 %572
    %v574 = vlaneseq
    %v575 = vshrl.u32 %v574, 7
    %v576 = vadd.s32 %v575, 24
    %577 = vset.pattern.permute.xlu0 %v576
    %578 = vperm.xlu0 %577, %v555
    %v579 = vpop.permute.xlu0 %578
    %v580 = vperm.slane %v429, 6
    %v581 = vlaneseq
    %v582 = vshrl.u32 %v581, 7
    %584 = vset.pattern.permute.xlu0 %v582
    %585 = vperm.xlu0 %584, %v580
    %v586 = vpop.permute.xlu0 %585
    %v587 = vlaneseq
    %v588 = vshrl.u32 %v587, 7
    %v589 = vadd.s32 %v588, 8
    %590 = vset.pattern.permute.xlu0 %v589
    %591 = vperm.xlu0 %590, %v580
    %v592 = vpop.permute.xlu0 %591
    %v593 = vlaneseq
    %v594 = vshrl.u32 %v593, 7
    %v595 = vadd.s32 %v594, 16
    %596 = vset.pattern.permute.xlu0 %v595
    %597 = vperm.xlu0 %596, %v580
    %v598 = vpop.permute.xlu0 %597
    %v599 = vlaneseq
    %v600 = vshrl.u32 %v599, 7
    %v601 = vadd.s32 %v600, 24
    %602 = vset.pattern.permute.xlu0 %v601
    %603 = vperm.xlu0 %602, %v580
    %v604 = vpop.permute.xlu0 %603
    %v605 = vperm.slane %v429, 7
    %v606 = vlaneseq
    %v607 = vshrl.u32 %v606, 7
    %609 = vset.pattern.permute.xlu0 %v607
    %610 = vperm.xlu0 %609, %v605
    %v611 = vpop.permute.xlu0 %610
    %v612 = vlaneseq
    %v613 = vshrl.u32 %v612, 7
    %v614 = vadd.s32 %v613, 8
    %615 = vset.pattern.permute.xlu0 %v614
    %616 = vperm.xlu0 %615, %v605
    %v617 = vpop.permute.xlu0 %616
    %v618 = vlaneseq
    %v619 = vshrl.u32 %v618, 7
    %v620 = vadd.s32 %v619, 16
    %621 = vset.pattern.permute.xlu0 %v620
    %622 = vperm.xlu0 %621, %v605
    %v623 = vpop.permute.xlu0 %622
    %v624 = vlaneseq
    %v625 = vshrl.u32 %v624, 7
    %v626 = vadd.s32 %v625, 24
    %627 = vset.pattern.permute.xlu0 %v626
    %628 = vperm.xlu0 %627, %v605
    %v629 = vpop.permute.xlu0 %628
    %v630 = vmul.f32 %v37, %v436
    %v631 = vmul.f32 %v38, %v436
    %v632 = vmul.f32 %v39, %v442
    %v633 = vmul.f32 %v40, %v442
    %v634 = vmul.f32 %v41, %v448
    %v635 = vmul.f32 %v42, %v448
    %v636 = vmul.f32 %v43, %v454
    %v637 = vmul.f32 %v44, %v454
    %v638 = vmul.f32 %v45, %v461
    %v639 = vmul.f32 %v46, %v461
    %v640 = vmul.f32 %v47, %v467
    %v641 = vmul.f32 %v48, %v467
    %v642 = vmul.f32 %v49, %v473
    %v643 = vmul.f32 %v50, %v473
    %v644 = vmul.f32 %v51, %v479
    %v645 = vmul.f32 %v52, %v479
    %v646 = vmul.f32 %v53, %v486
    %v647 = vmul.f32 %v54, %v486
    %v648 = vmul.f32 %v55, %v492
    %v649 = vmul.f32 %v56, %v492
    %v650 = vmul.f32 %v57, %v498
    %v651 = vmul.f32 %v58, %v498
    %v652 = vmul.f32 %v59, %v504
    %v653 = vmul.f32 %v60, %v504
    %v654 = vmul.f32 %v61, %v511
    %v655 = vmul.f32 %v62, %v511
    %v656 = vmul.f32 %v63, %v517
    %v657 = vmul.f32 %v64, %v517
    %v658 = vmul.f32 %v65, %v523
    %v659 = vmul.f32 %v66, %v523
    %v660 = vmul.f32 %v67, %v529
    %v661 = vmul.f32 %v68, %v529
    %v662 = vmul.f32 %v69, %v536
    %v663 = vmul.f32 %v70, %v536
    %v664 = vmul.f32 %v71, %v542
    %v665 = vmul.f32 %v72, %v542
    %v666 = vmul.f32 %v73, %v548
    %v667 = vmul.f32 %v74, %v548
    %v668 = vmul.f32 %v75, %v554
    %v669 = vmul.f32 %v76, %v554
    %v670 = vmul.f32 %v77, %v561
    %v671 = vmul.f32 %v78, %v561
    %v672 = vmul.f32 %v79, %v567
    %v673 = vmul.f32 %v80, %v567
    %v674 = vmul.f32 %v81, %v573
    %v675 = vmul.f32 %v82, %v573
    %v676 = vmul.f32 %v83, %v579
    %v677 = vmul.f32 %v84, %v579
    %v678 = vmul.f32 %v85, %v586
    %v679 = vmul.f32 %v86, %v586
    %v680 = vmul.f32 %v87, %v592
    %v681 = vmul.f32 %v88, %v592
    %v682 = vmul.f32 %v89, %v598
    %v683 = vmul.f32 %v90, %v598
    %v684 = vmul.f32 %v91, %v604
    %v685 = vmul.f32 %v92, %v604
    %v686 = vmul.f32 %v93, %v611
    %v687 = vmul.f32 %v94, %v611
    %v688 = vmul.f32 %v95, %v617
    %v689 = vmul.f32 %v96, %v617
    %v690 = vmul.f32 %v97, %v623
    %v691 = vmul.f32 %v98, %v623
    %v692 = vmul.f32 %v99, %v629
    %v693 = vmul.f32 %v100, %v629
    %694 = vst [vmem:[#allocation5] sm:$0xff] %v630
    %695 = vst [vmem:[#allocation5 + $0x8] sm:$0xff] %v631
    %696 = vst [vmem:[#allocation5 + $0x10] sm:$0xff] %v632
    %697 = vst [vmem:[#allocation5 + $0x18] sm:$0xff] %v633
    %698 = vst [vmem:[#allocation5 + $0x20] sm:$0xff] %v634
    %699 = vst [vmem:[#allocation5 + $0x28] sm:$0xff] %v635
    %700 = vst [vmem:[#allocation5 + $0x30] sm:$0xff] %v636
    %701 = vst [vmem:[#allocation5 + $0x38] sm:$0xff] %v637
    %702 = vst [vmem:[#allocation5 + $0x40] sm:$0xff] %v638
    %703 = vst [vmem:[#allocation5 + $0x48] sm:$0xff] %v639
    %704 = vst [vmem:[#allocation5 + $0x50] sm:$0xff] %v640
    %705 = vst [vmem:[#allocation5 + $0x58] sm:$0xff] %v641
    %706 = vst [vmem:[#allocation5 + $0x60] sm:$0xff] %v642
    %707 = vst [vmem:[#allocation5 + $0x68] sm:$0xff] %v643
    %708 = vst [vmem:[#allocation5 + $0x70] sm:$0xff] %v644
    %709 = vst [vmem:[#allocation5 + $0x78] sm:$0xff] %v645
    %710 = vst [vmem:[#allocation5 + $0x80] sm:$0xff] %v646
    %711 = vst [vmem:[#allocation5 + $0x88] sm:$0xff] %v647
    %712 = vst [vmem:[#allocation5 + $0x90] sm:$0xff] %v648
    %713 = vst [vmem:[#allocation5 + $0x98] sm:$0xff] %v649
    %714 = vst [vmem:[#allocation5 + $0xa0] sm:$0xff] %v650
    %715 = vst [vmem:[#allocation5 + $0xa8] sm:$0xff] %v651
    %716 = vst [vmem:[#allocation5 + $0xb0] sm:$0xff] %v652
    %717 = vst [vmem:[#allocation5 + $0xb8] sm:$0xff] %v653
    %718 = vst [vmem:[#allocation5 + $0xc0] sm:$0xff] %v654
    %719 = vst [vmem:[#allocation5 + $0xc8] sm:$0xff] %v655
    %720 = vst [vmem:[#allocation5 + $0xd0] sm:$0xff] %v656
    %721 = vst [vmem:[#allocation5 + $0xd8] sm:$0xff] %v657
    %722 = vst [vmem:[#allocation5 + $0xe0] sm:$0xff] %v658
    %723 = vst [vmem:[#allocation5 + $0xe8] sm:$0xff] %v659
    %724 = vst [vmem:[#allocation5 + $0xf0] sm:$0xff] %v660
    %725 = vst [vmem:[#allocation5 + $0xf8] sm:$0xff] %v661
    %726 = vst [vmem:[#allocation5 + $0x100] sm:$0xff] %v662
    %727 = vst [vmem:[#allocation5 + $0x108] sm:$0xff] %v663
    %728 = vst [vmem:[#allocation5 + $0x110] sm:$0xff] %v664
    %729 = vst [vmem:[#allocation5 + $0x118] sm:$0xff] %v665
    %730 = vst [vmem:[#allocation5 + $0x120] sm:$0xff] %v666
    %731 = vst [vmem:[#allocation5 + $0x128] sm:$0xff] %v667
    %732 = vst [vmem:[#allocation5 + $0x130] sm:$0xff] %v668
    %733 = vst [vmem:[#allocation5 + $0x138] sm:$0xff] %v669
    %734 = vst [vmem:[#allocation5 + $0x140] sm:$0xff] %v670
    %735 = vst [vmem:[#allocation5 + $0x148] sm:$0xff] %v671
    %736 = vst [vmem:[#allocation5 + $0x150] sm:$0xff] %v672
    %737 = vst [vmem:[#allocation5 + $0x158] sm:$0xff] %v673
    %738 = vst [vmem:[#allocation5 + $0x160] sm:$0xff] %v674
    %739 = vst [vmem:[#allocation5 + $0x168] sm:$0xff] %v675
    %740 = vst [vmem:[#allocation5 + $0x170] sm:$0xff] %v676
    %741 = vst [vmem:[#allocation5 + $0x178] sm:$0xff] %v677
    %742 = vst [vmem:[#allocation5 + $0x180] sm:$0xff] %v678
    %743 = vst [vmem:[#allocation5 + $0x188] sm:$0xff] %v679
    %744 = vst [vmem:[#allocation5 + $0x190] sm:$0xff] %v680
    %745 = vst [vmem:[#allocation5 + $0x198] sm:$0xff] %v681
    %746 = vst [vmem:[#allocation5 + $0x1a0] sm:$0xff] %v682
    %747 = vst [vmem:[#allocation5 + $0x1a8] sm:$0xff] %v683
    %748 = vst [vmem:[#allocation5 + $0x1b0] sm:$0xff] %v684
    %749 = vst [vmem:[#allocation5 + $0x1b8] sm:$0xff] %v685
    %750 = vst [vmem:[#allocation5 + $0x1c0] sm:$0xff] %v686
    %751 = vst [vmem:[#allocation5 + $0x1c8] sm:$0xff] %v687
    %752 = vst [vmem:[#allocation5 + $0x1d0] sm:$0xff] %v688
    %753 = vst [vmem:[#allocation5 + $0x1d8] sm:$0xff] %v689
    %754 = vst [vmem:[#allocation5 + $0x1e0] sm:$0xff] %v690
    %755 = vst [vmem:[#allocation5 + $0x1e8] sm:$0xff] %v691
    %756 = vst [vmem:[#allocation5 + $0x1f0] sm:$0xff] %v692
    %757 = vst [vmem:[#allocation5 + $0x1f8] sm:$0xff] %v693
    // Predicated region
    $region26: #{tpu_custom_call.1} parent=1 // pred_check
      _
    $region27: #{tpu_custom_call.1} parent=1 // pred_check_branch
      %759 = sbr.rel (0) target = $region29
    $region28: #{tpu_custom_call.1} parent=1 // pred_region
      %761 = vsyncadd [#allocation4], 0
      %s762 = sshll.u32 [#allocation5], 4
      %s763 = int_to_ptr.vmem [resolvable:$true] %s762
      %s764 = sshll.u32 %s5, 4
      %s765 = int_to_ptr.hbm [resolvable:$true] %s764
      %770 = dma.vmem_to_hbm [thread:$0]  %s763, 8192, %s765, [#allocation4], 256, 256, 16
    $region29: #{tpu_custom_call.1} parent=1 // pred_fallthru
      _
    // Predicated region
    $region30: #{tpu_custom_call.1} parent=1 // pred_check
      _
    $region31: #{tpu_custom_call.1} parent=1 // pred_check_branch
      %772 = sbr.rel (0) target = $region33
    $region32: #{tpu_custom_call.1} parent=1 // pred_region
      %774 = dma.done [#allocation4], 8192
    $region33: #{tpu_custom_call.1} parent=1 // pred_fallthru
      _
    %775 = vsyncpa [#allocation3], 1
    %776 = vsyncpa [#allocation4], 1

</llo_original>
